<compile_context>
chip_gen: v7x
topology: tpu7x:2x2x1
jax: 0.10.0
libtpu: 0.0.40
codegen_flags: <defaults>
</compile_context>

<pallas_src>
import math
from functools import partial

import jax
import jax.numpy as jnp
from jax.experimental import pallas as pl
from jax.experimental.pallas import tpu as pltpu
import numpy as np


def _round_up(n, m):
    return -(-n // m) * m


def _max_identity(dtype):
    if jnp.issubdtype(dtype, jnp.floating):
        return float("-inf")
    if jnp.issubdtype(dtype, jnp.integer):
        return int(jnp.iinfo(dtype).min)
    raise TypeError(f"GlobalMaxPool1d: unsupported dtype {dtype}")


def _gmp_kernel(x_ref, o_ref, *, t_sub, n_sub, t_total, t_tile, mask_tail, neg_ident):
    """One (b_tile, t_tile, c_tile) input block -> running max in the (b_tile, c_tile) output block."""
    t = pl.program_id(2)  # reduction (time) grid axis — last, "arbitrary"

    def chunk_max(k, acc):
        start = pl.multiple_of(k * t_sub, t_sub)
        chunk = x_ref[:, pl.ds(start, t_sub), :]
        if mask_tail:
            # The last T block is DMA-clamped; rows past the true length hold stale VMEM
            # data. Replace them with the max identity (no HBM padding pass needed).
            row = start + jax.lax.broadcasted_iota(jnp.int32, chunk.shape, 1)
            valid = row < (t_total - t * t_tile)
            chunk = jnp.where(valid, chunk, neg_ident)
        return jnp.maximum(acc, jnp.max(chunk, axis=1))

    tile_max = jax.lax.fori_loop(
        0, n_sub, chunk_max,
        jnp.full(o_ref.shape, neg_ident, dtype=x_ref.dtype),
        unroll=True,
    )

    @pl.when(t == 0)
    def _init():
        o_ref[...] = tile_max

    @pl.when(t > 0)
    def _accumulate():
        o_ref[...] = jnp.maximum(o_ref[...], tile_max)


def global_max_pool1d(x, *, block_bytes=8 * 1024 * 1024):
    """GlobalMaxPool1d.forward for x of shape (B, T, C); returns (B, C) = max over T."""
    assert x.ndim == 3, "expected (batch, length, channels)"
    B0, T0, C0 = x.shape
    dtype = x.dtype
    itemsize = jnp.dtype(dtype).itemsize
    sub = {1: 32, 2: 16}.get(itemsize, 8)  # dtype-packed sublane multiple
    neg = _max_identity(dtype)

    B, T, C = B0, T0, C0

    # ---- small-C lane folding: (B,T,C) -> (B, T//f, f*C) is a free reshape of
    # contiguous data; channels then fill the 128-lane vreg axis so loads/stores are
    # lane-dense. Finished with a tiny (B, f, C) max after the kernel. ------------------
    fold = 1
    if 0 < C < 128:
        f = 128 // math.gcd(C, 128)
        if f > 1 and T % f == 0:
            fold = f
            x = x.reshape(B, T // f, f * C)
            T, C = T // f, f * C

    # ---- robustness guard: huge non-tileable B / C would force full-dim blocks far
    # beyond VMEM (worst on v7x's 64 MiB). Pad once with the max identity to a tileable
    # multiple and slice the output. Rare fallback; common shapes never hit this. -------
    pad_b = _round_up(B, 8) - B if (B % 8 != 0 and B > 64) else 0
    pad_c = _round_up(C, 128) - C if (C % 128 != 0 and C > 512) else 0
    if pad_b or pad_c:
        x = jnp.pad(x, ((0, pad_b), (0, 0), (0, pad_c)), constant_values=neg)
        B += pad_b
        C += pad_c

    # ---- channel (lane) tile: 128-dense and as wide as practical -----------------------
    if C % 128 == 0:
        c_tile = C
        if C > 512:
            for cand in (512, 384, 256, 128):
                if C % cand == 0:
                    c_tile = cand
                    break
    else:
        c_tile = C  # small non-128 channel count: full dim (legal block shape)

    # ---- batch tile (output sublane axis) -----------------------------------------------
    b_tile = 8 if B % 8 == 0 else B

    # ---- v7x: give both TensorCores work when the parallel grid collapses to 1 block ----
    if (B // b_tile) * (C // c_tile) < 2:
        if c_tile % 256 == 0:
            c_tile //= 2
        elif b_tile % 16 == 0:
            b_tile //= 2

    # ---- time (reduction) tile under the per-block VMEM budget --------------------------
    row_bytes = b_tile * c_tile * itemsize
    t_budget = max(sub, (block_bytes // row_bytes) // sub * sub)
    if T <= t_budget:
        t_tile = T            # single reduction step; full-dim block is always legal
    else:
        t_tile = t_budget     # multiple of the dtype sublane packing
    n_t = -(-T // t_tile)
    mask_tail = (T % t_tile) != 0  # ragged tail masked in-kernel (no HBM pad pass)

    # ---- strip-mine the in-block reduction (<=256-row chunks) so vregs don't spill ------
    if t_tile <= 256:
        t_sub = t_tile
    else:
        t_sub = t_tile
        for cand in range(256, sub - 1, -sub):
            if t_tile % cand == 0:
                t_sub = cand
                break
    n_sub = t_tile // t_sub

    kernel = partial(_gmp_kernel, t_sub=t_sub, n_sub=n_sub, t_total=T,
                     t_tile=t_tile, mask_tail=mask_tail, neg_ident=neg)

    grid = (B // b_tile, C // c_tile, n_t)

    out = pl.pallas_call(
        kernel,
        out_shape=jax.ShapeDtypeStruct((B, C), dtype),
        grid_spec=pltpu.PrefetchScalarGridSpec(
            num_scalar_prefetch=0,
            grid=grid,
            in_specs=[pl.BlockSpec((b_tile, t_tile, c_tile), lambda b, c, t: (b, t, c))],
            # Output block index ignores t -> VMEM-resident running-max accumulator
            # across the reduction axis, written back to HBM once per (b, c) block.
            out_specs=pl.BlockSpec((b_tile, c_tile), lambda b, c, t: (b, c)),
        ),
        compiler_params=pltpu.CompilerParams(
            dimension_semantics=("parallel", "parallel", "arbitrary"),
            # 2x8 MiB double-buffered input + output fits; bumps v5e's 16 MiB scoped
            # default so pipelining survives, stays well under v7x's 64 MiB physical.
            vmem_limit_bytes=32 * 1024 * 1024,
        ),
        cost_estimate=pl.CostEstimate(
            flops=B * T * C,
            transcendentals=0,
            bytes_accessed=(B * T * C + B * C) * itemsize,
        ),
    )(x)

    # ---- undo the (rare) padding and the small-C lane folding ---------------------------
    if pad_b or pad_c:
        out = out[: B - pad_b, : C - pad_c]
    if fold > 1:
        out = jnp.max(out.reshape(B0, fold, C0), axis=1)
    return out


# ---------------- pure-JAX reference (mirrors the PyTorch module exactly) ----------------
def _ref_global_max_pool1d(x):
    # permute(0,2,1) -> AdaptiveMaxPool1d(1) -> squeeze(-1)  ==  max over axis 1
    return jnp.max(x, axis=1)


if __name__ == "__main__":
    key = jax.random.PRNGKey(0)
    k_small, k_big, k_bf16 = jax.random.split(key, 3)

    # Small shape implied by the forward: (batch, length, channels) = (2, 16, 8).
    # Exercises the small-C lane-folding path ((2,16,8) -> (2,1,128)).
    x_small = jax.random.normal(k_small, (2, 16, 8), dtype=jnp.float32)
    out_small = jax.block_until_ready(global_max_pool1d(x_small))
    ref_small = jax.block_until_ready(_ref_global_max_pool1d(x_small))
    assert out_small.shape == (2, 8), out_small.shape
    np.testing.assert_array_equal(np.asarray(out_small), np.asarray(ref_small))

    # Larger shape: 128-lane channels, 8-row batch tiles, whole T in one 4 MiB block.
    x_big = jax.random.normal(k_big, (8, 1000, 128), dtype=jnp.float32)
    out_big = jax.block_until_ready(global_max_pool1d(x_big))
    ref_big = jax.block_until_ready(_ref_global_max_pool1d(x_big))
    assert out_big.shape == (8, 128), out_big.shape
    np.testing.assert_array_equal(np.asarray(out_big), np.asarray(ref_big))

    # Force a multi-block reduction with a ragged tail (T=1000, t_tile=256) to exercise
    # the in-kernel iota/where masking path (no wrapper pad).
    out_tiled = jax.block_until_ready(global_max_pool1d(x_big, block_bytes=1 << 20))
    np.testing.assert_array_equal(np.asarray(out_tiled), np.asarray(ref_big))

    # bf16 path: dtype-packed sublane multiple (16) + masked ragged tail.
    x_bf16 = jax.random.normal(k_bf16, (4, 300, 256), dtype=jnp.bfloat16)
    out_bf16 = jax.block_until_ready(global_max_pool1d(x_bf16, block_bytes=256 * 1024))
    ref_bf16 = jax.block_until_ready(_ref_global_max_pool1d(x_bf16))
    assert out_bf16.shape == (4, 256), out_bf16.shape
    np.testing.assert_array_equal(np.asarray(out_bf16), np.asarray(ref_bf16))

    print("KERNEL_OK")
</pallas_src>

<mosaic_0001>
module attributes {stable_mosaic.version = 11 : i64} {
  func.func @_gmp_kernel(%arg0: i32, %arg1: i32, %arg2: i32, %arg3: memref<2x1x128xf32, #tpu.memory_space<vmem>>, %arg4: memref<2x128xf32, #tpu.memory_space<vmem>>) attributes {dimension_semantics = [#tpu.dimension_semantics<parallel>, #tpu.dimension_semantics<parallel>, #tpu.dimension_semantics<arbitrary>], iteration_bounds = array<i64: 1, 1, 1>, scalar_prefetch = 0 : i64, scratch_operands = 0 : i64, tpu.core_type = #tpu.core_type<tc>, window_params = [{transform_indices = @transform_0, window_bounds = array<i64: 2, 1, 128>}, {transform_indices = @transform_1, window_bounds = array<i64: 2, 128>}]} {
    %cst = arith.constant 0xFF800000 : f32
    %0 = vector.broadcast %cst : f32 to vector<2x128xf32>
    %c0_i32 = arith.constant 0 : i32
    %c1_i32 = arith.constant 1 : i32
    %1 = arith.muli %c0_i32, %c1_i32 : i32
    %2 = tpu.assume_multiple %1, 1 : i32
    %c0 = arith.constant 0 : index
    %3 = arith.index_cast %2 : i32 to index
    %c0_0 = arith.constant 0 : index
    %4 = vector.load %arg3[%c0, %3, %c0_0] : memref<2x1x128xf32, #tpu.memory_space<vmem>>, vector<2x1x128xf32>
    %cst_1 = arith.constant dense<0xFF800000> : vector<2x128xf32>
    %5 = vector.multi_reduction <maximumf>, %4, %cst_1 [1] : vector<2x1x128xf32> to vector<2x128xf32>
    %6 = arith.maximumf %0, %5 : vector<2x128xf32>
    %c1_i32_2 = arith.constant 1 : i32
    %c0_i32_3 = arith.constant 0 : i32
    %7 = arith.cmpi eq, %arg2, %c0_i32_3 : i32
    %8 = arith.extui %7 : i1 to i32
    %c0_i32_4 = arith.constant 0 : i32
    %9 = arith.cmpi ne, %8, %c0_i32_4 : i32
    scf.if %9 {
      %c0_7 = arith.constant 0 : index
      %c0_8 = arith.constant 0 : index
      %13 = vector.load %arg4[%c0_7, %c0_8] : memref<2x128xf32, #tpu.memory_space<vmem>>, vector<2x128xf32>
      tpu.vector_store %arg4[%c0_7, %c0_8], %6 {strides = array<i32>} : memref<2x128xf32, #tpu.memory_space<vmem>>, vector<2x128xf32>,
    } else {
    }
    %c0_i32_5 = arith.constant 0 : i32
    %10 = arith.cmpi sgt, %arg2, %c0_i32_5 : i32
    %11 = arith.extui %10 : i1 to i32
    %c0_i32_6 = arith.constant 0 : i32
    %12 = arith.cmpi ne, %11, %c0_i32_6 : i32
    scf.if %12 {
      %c0_7 = arith.constant 0 : index
      %c0_8 = arith.constant 0 : index
      %13 = vector.load %arg4[%c0_7, %c0_8] : memref<2x128xf32, #tpu.memory_space<vmem>>, vector<2x128xf32>
      %14 = arith.maximumf %13, %6 : vector<2x128xf32>
      %c0_9 = arith.constant 0 : index
      %c0_10 = arith.constant 0 : index
      %15 = vector.load %arg4[%c0_9, %c0_10] : memref<2x128xf32, #tpu.memory_space<vmem>>, vector<2x128xf32>
      tpu.vector_store %arg4[%c0_9, %c0_10], %14 {strides = array<i32>} : memref<2x128xf32, #tpu.memory_space<vmem>>, vector<2x128xf32>,
    } else {
    }
    return
  }
  func.func @transform_0(%arg0: i32, %arg1: i32, %arg2: i32) -> (i32, i32, i32) {
    %c0_i32 = arith.constant 0 : i32
    return %arg0, %arg2, %arg1 : i32, i32, i32
  }
  func.func @transform_1(%arg0: i32, %arg1: i32, %arg2: i32) -> (i32, i32) {
    %c0_i32 = arith.constant 0 : i32
    return %arg0, %arg1 : i32, i32
  }
}

</mosaic_0001>

<llo_original>
// kernel: tpu_custom_call.1
$region0: #{tpu_custom_call.1}
  #allocation0 [shape = 'u32[]', space=smem, size = 0x4, offset = 0x4, fixed_abs, tag = 'smem constant byte address 0x4 - core index']
  #allocation1 [shape = 'u32[144,128]{1,0:T(1,128)}', space=vmem, size = 0x12000, scoped, tag = 'internal scratch']
  %s0 = inlined_call_operand.hbm [shape: f32[2,1,128], index: 0, kind: input, shape index: {}]
  %s1 = inlined_call_operand.hbm [shape: f32[2,128], index: 1, kind: output, shape index: {}]
  %s2 = sld [smem:[#allocation0]]
  $region26: #{tpu_custom_call.1} parent=0
    _
  %s4 = ssub.s32 1, %s2
  %s5 = scalar_select 0, %s4, %s2
  $region1: #{tpu_custom_call.1} parent=0
    #allocation2 [shape = 'u8[1024]{0}', space=vmem, size = 0x400, scoped, tag = 'input window, operand 0, single buffered']
    #allocation3 [shape = 's32[1]{0}', space=sflag, size = 0x4, scoped, tag = 'scoped memory for tpu_custom_call.1']
    #allocation4 [shape = 's32[1]{0}', space=sflag, size = 0x4, scoped, tag = 'scoped memory for tpu_custom_call.1']
    #allocation5 [shape = 'u8[1024]{0}', space=vmem, size = 0x400, scoped, tag = 'output window, operand 0, single buffered']
    %6 = vsyncpa [#allocation3], 0
    %7 = vsyncpa [#allocation4], 0
    // Predicated region
    $region2: #{tpu_custom_call.1} parent=1 // pred_check
      _
    $region3: #{tpu_custom_call.1} parent=1 // pred_check_branch
      %9 = sbr.rel (0) target = $region5
    $region4: #{tpu_custom_call.1} parent=1 // pred_region
      %s11 = ssub.s32 32, 32
      %12 = vsyncadd [#allocation3], %s11
      %s13 = sshll.u32 [#allocation2], 4
      %s14 = int_to_ptr.vmem [resolvable:$true] %s13
      %19 = dma.hbm_to_vmem [thread:$0]  %s0, 32, %s14, [#allocation3], 16, 16, 1
    $region5: #{tpu_custom_call.1} parent=1 // pred_fallthru
      _
    // Predicated region
    $region6: #{tpu_custom_call.1} parent=1 // pred_check
      _
    $region7: #{tpu_custom_call.1} parent=1 // pred_check_branch
      %21 = sbr.rel (0) target = $region9
    $region8: #{tpu_custom_call.1} parent=1 // pred_region
      %22 = dma.done [#allocation3], 32
    $region9: #{tpu_custom_call.1} parent=1 // pred_fallthru
      _
    %v23 = vld [vmem:[#allocation2] sm:$0x1]
    %v24 = vld [vmem:[#allocation2 + $0x1] sm:$0x1]
    %p25 = scmp.eq.s32.totalorder 0, 0
    // Predicated region
    $region10: #{tpu_custom_call.1} parent=1 // pred_check
      %p26 = pneg %p25
    $region11: #{tpu_custom_call.1} parent=1 // pred_check_branch
      %28 = sbr.rel (%p26) target = $region13
    $region12: #{tpu_custom_call.1} parent=1 // pred_region
      %v31 = vcombine.low %v23, %v24
      %v33 = vunpack.c.l.s4 1966171168
      %v34 = vunpack.c.0.s8 %v33
      %v35 = vlaneseq
      %v36 = vshrl.u32 %v35, 7
      %v37 = vsub.s32 %v34, %v36
      %v38 = vrot.slane %v31, %v37
      %v40 = vunpack.c.l.s4 1966171168
      %v41 = vunpack.c.0.s8 %v40
      %v42 = vlaneseq
      %v43 = vshrl.u32 %v42, 7
      %v44 = vsub.s32 %v41, %v43
      %v45 = vrot.slane %v38, %v44
      %47 = vst [vmem:[#allocation5] sm:$0x3] %v45
    $region13: #{tpu_custom_call.1} parent=1 // pred_fallthru
      _
    %p48 = scmp.gt.s32.totalorder 0, 0
    // Predicated region
    $region14: #{tpu_custom_call.1} parent=1 // pred_check
      %p49 = pneg %p48
    $region15: #{tpu_custom_call.1} parent=1 // pred_check_branch
      %51 = sbr.rel (%p49) target = $region17
    $region16: #{tpu_custom_call.1} parent=1 // pred_region
      %v52 = vld [vmem:[#allocation5] sm:$0x3]
      %v55 = vcombine.low %v23, %v24
      %v57 = vunpack.c.l.s4 1966171168
      %v58 = vunpack.c.0.s8 %v57
      %v59 = vlaneseq
      %v60 = vshrl.u32 %v59, 7
      %v61 = vsub.s32 %v58, %v60
      %v62 = vrot.slane %v55, %v61
      %v64 = vunpack.c.l.s4 1966171168
      %v65 = vunpack.c.0.s8 %v64
      %v66 = vlaneseq
      %v67 = vshrl.u32 %v66, 7
      %v68 = vsub.s32 %v65, %v67
      %v69 = vrot.slane %v62, %v68
      %v71 = vmax.f32 %v52, %v69
      %72 = vst [vmem:[#allocation5] sm:$0x3] %v71
    $region17: #{tpu_custom_call.1} parent=1 // pred_fallthru
      _
    // Predicated region
    $region18: #{tpu_custom_call.1} parent=1 // pred_check
      _
    $region19: #{tpu_custom_call.1} parent=1 // pred_check_branch
      %74 = sbr.rel (0) target = $region21
    $region20: #{tpu_custom_call.1} parent=1 // pred_region
      %s76 = ssub.s32 32, 32
      %77 = vsyncadd [#allocation4], %s76
      %s79 = sshll.u32 [#allocation5], 4
      %s80 = int_to_ptr.vmem [resolvable:$true] %s79
      %82 = dma.vmem_to_hbm [thread:$0]  %s80, 32, %s1, [#allocation4]
    $region21: #{tpu_custom_call.1} parent=1 // pred_fallthru
      _
    // Predicated region
    $region22: #{tpu_custom_call.1} parent=1 // pred_check
      _
    $region23: #{tpu_custom_call.1} parent=1 // pred_check_branch
      %84 = sbr.rel (0) target = $region25
    $region24: #{tpu_custom_call.1} parent=1 // pred_region
      %85 = dma.done [#allocation4], 32
    $region25: #{tpu_custom_call.1} parent=1 // pred_fallthru
      _
    %86 = vsyncpa [#allocation3], 1
    %87 = vsyncpa [#allocation4], 1

</llo_original>
